<compile_context>
chip_gen: v6e
topology: v6e:2x2x1
jax: 0.10.0
libtpu: 0.0.40
codegen_flags: <defaults>
</compile_context>

<pallas_src>
import functools

import jax
import jax.numpy as jnp
from jax.experimental import pallas as pl
from jax.experimental.pallas import tpu as pltpu


# ----------------------------- config (synthetic) -----------------------------
DIM_FEAT = 32
DIM_HIDDEN = (64, 64)
DIM_ACT = 8
LOG_STD_INIT = 0.0
BATCH = 16
LANE = 128              # packed weight / bias / output lane width (dense stores)
MAX_BATCH_TILE = 512    # rows per grid step for rollout-scale batches
                        # (~0.4 MiB/buffer double-buffered; safe within v7x 64 MiB VMEM)


# ------------------------------- Pallas kernel --------------------------------
def pinet_mlp_kernel(x_ref, w_ref, b_ref, mu_ref, *, f, h0, h1):
    """Fused 3-layer MLP on one batch tile: (tb, f) -> (tb, LANE)."""
    x = x_ref[...]            # (tb, f)          bf16
    w = w_ref[...]            # (f+h0+h1, LANE)  bf16, layers stacked along rows
    b = b_ref[...]            # (8, LANE)        f32,  row l = bias of layer l

    # Layer 0: Linear (bf16 in, f32 accumulate) + f32 bias + tanh
    h = jnp.dot(x, w[0:f, 0:h0], preferred_element_type=jnp.float32) + b[0:1, 0:h0]
    h = jnp.tanh(h)
    # Layer 1: Linear + tanh
    h = jnp.dot(h.astype(jnp.bfloat16), w[f:f + h0, 0:h1],
                preferred_element_type=jnp.float32) + b[1:2, 0:h1]
    h = jnp.tanh(h)
    # Output layer: Linear, no activation (activate_output=False). The packed W2/b2
    # columns beyond dim_act are zero, so this is a full-lane, unmasked store.
    mu = jnp.dot(h.astype(jnp.bfloat16), w[f + h0:f + h0 + h1, :],
                 preferred_element_type=jnp.float32) + b[2:3, :]
    mu_ref[...] = mu.astype(mu_ref.dtype)


# ------------------------- one-time parameter packing -------------------------
def prepare_params(params):
    """Hoisted per-call work: pad + pack + cast weights once (not every forward)."""
    w0, b0, w1, b1, w2, b2, log_std = params
    f, h0 = w0.shape
    h1 = w1.shape[1]
    a = w2.shape[1]
    width = ((max(h0, h1, a) + LANE - 1) // LANE) * LANE
    rows = f + h0 + h1

    w_pack = jnp.zeros((rows, width), jnp.float32)
    w_pack = w_pack.at[0:f, 0:h0].set(w0)
    w_pack = w_pack.at[f:f + h0, 0:h1].set(w1)
    w_pack = w_pack.at[f + h0:rows, 0:a].set(w2)
    w_pack = w_pack.astype(jnp.bfloat16)          # native MXU input dtype

    b_pack = jnp.zeros((8, width), jnp.float32)   # biases stay f32 (post-accumulate)
    b_pack = b_pack.at[0, 0:h0].set(b0[0])
    b_pack = b_pack.at[1, 0:h1].set(b1[0])
    b_pack = b_pack.at[2, 0:a].set(b2[0])

    return {"w": w_pack, "b": b_pack, "log_std": log_std, "dims": (f, h0, h1, a)}


# --------------------------------- forward ------------------------------------
def pinet_forward(x, prepared):
    """Runs the fused MLP kernel and returns (mu, log_std) like PiNet.forward."""
    f, h0, h1, a = prepared["dims"]
    w_pack = prepared["w"]
    b_pack = prepared["b"]
    rows, width = w_pack.shape
    bsz = x.shape[0]

    tb = bsz if bsz <= MAX_BATCH_TILE else MAX_BATCH_TILE
    bsz_pad = ((bsz + tb - 1) // tb) * tb

    xb = x.astype(jnp.bfloat16)                   # only per-call cast
    if bsz_pad != bsz:
        xb = jnp.pad(xb, ((0, bsz_pad - bsz), (0, 0)))

    grid = (bsz_pad // tb,)
    flops = 2 * bsz_pad * (f * h0 + h0 * h1 + h1 * width)
    transcendentals = bsz_pad * (h0 + h1)         # two tanh layers
    bytes_accessed = (xb.size * 2 + w_pack.size * 2 + b_pack.size * 4
                      + bsz_pad * width * 4)

    kernel = functools.partial(pinet_mlp_kernel, f=f, h0=h0, h1=h1)
    vmem = pltpu.MemorySpace.VMEM

    mu_pad = pl.pallas_call(
        kernel,
        grid=grid,
        in_specs=[
            # x streams over batch tiles.
            pl.BlockSpec((tb, f), lambda i: (i, 0), memory_space=vmem),
            # Constant index_map: packed weights / biases DMA'd once, VMEM-resident.
            pl.BlockSpec((rows, width), lambda i: (0, 0), memory_space=vmem),
            pl.BlockSpec((8, width), lambda i: (0, 0), memory_space=vmem),
        ],
        out_specs=pl.BlockSpec((tb, width), lambda i: (i, 0), memory_space=vmem),
        out_shape=jax.ShapeDtypeStruct((bsz_pad, width), jnp.float32),
        compiler_params=pltpu.CompilerParams(dimension_semantics=("parallel",)),
        cost_estimate=pl.CostEstimate(flops=flops,
                                      transcendentals=transcendentals,
                                      bytes_accessed=bytes_accessed),
    )(xb, w_pack, b_pack)

    # TODO(synk): at rollout-scale batches the padded f32 writeback dominates HBM
    # traffic; measure bf16 output vs. storing the unpadded (tb, dim_act) block.
    mu = mu_pad[:bsz, :a]
    # log_std is simply a learnable parameter returned alongside mu (no compute).
    return mu, prepared["log_std"]


# -------------------------- deterministic param init --------------------------
def init_params(key):
    dims = (DIM_FEAT,) + DIM_HIDDEN + (DIM_ACT,)
    params = []
    keys = jax.random.split(key, 2 * (len(dims) - 1))
    for li in range(len(dims) - 1):
        fan_in, fan_out = dims[li], dims[li + 1]
        bound = 1.0 / jnp.sqrt(fan_in)
        # stored as [in, out] (transpose of PyTorch's [out, in])
        w = jax.random.uniform(keys[2 * li], (fan_in, fan_out), jnp.float32, -bound, bound)
        b = jax.random.uniform(keys[2 * li + 1], (1, fan_out), jnp.float32, -bound, bound)
        params += [w, b]
    # log_std: use_sde=False -> shape (dim_act,), filled with log_std_init
    log_std = jnp.full((DIM_ACT,), LOG_STD_INIT, dtype=jnp.float32)
    params.append(log_std)
    return tuple(params)


# reference in plain JAX / f32 (for a correctness sanity check)
def pinet_reference(x, params):
    w0, b0, w1, b1, w2, b2, log_std = params
    h = jnp.tanh(x @ w0 + b0)
    h = jnp.tanh(h @ w1 + b1)
    mu = h @ w2 + b2
    return mu, log_std


if __name__ == "__main__":
    key = jax.random.PRNGKey(0)
    pkey, xkey = jax.random.split(key)
    params = init_params(pkey)
    prepared = prepare_params(params)                      # one-time weight packing
    x = jax.random.normal(xkey, (BATCH, DIM_FEAT), dtype=jnp.float32)

    mu, log_std = pinet_forward(x, prepared)
    mu = jax.block_until_ready(mu)
    log_std = jax.block_until_ready(log_std)

    mu_ref, ls_ref = pinet_reference(x, params)
    assert mu.shape == (BATCH, DIM_ACT)
    assert log_std.shape == (DIM_ACT,)
    # bf16 matmul inputs (f32 accumulation) -> loosened tolerance vs. f32 reference.
    assert jnp.allclose(mu, mu_ref, atol=2e-2, rtol=2e-2)
    assert jnp.allclose(log_std, ls_ref)

    print("KERNEL_OK")
</pallas_src>

<mosaic_0001>
module attributes {stable_mosaic.version = 11 : i64} {
  func.func @pinet_mlp_kernel(%arg0: i32, %arg1: memref<16x32xbf16, #tpu.memory_space<vmem>>, %arg2: memref<160x128xbf16, #tpu.memory_space<vmem>>, %arg3: memref<8x128xf32, #tpu.memory_space<vmem>>, %arg4: memref<16x128xf32, #tpu.memory_space<vmem>>) attributes {dimension_semantics = [#tpu.dimension_semantics<parallel>], iteration_bounds = array<i64: 1>, scalar_prefetch = 0 : i64, scratch_operands = 0 : i64, tpu.core_type = #tpu.core_type<tc>, window_params = [{transform_indices = @transform_0, window_bounds = array<i64: 16, 32>}, {pipeline_mode = #tpu.pipeline_mode<synchronous>, transform_indices = @transform_1, window_bounds = array<i64: 160, 128>}, {pipeline_mode = #tpu.pipeline_mode<synchronous>, transform_indices = @transform_2, window_bounds = array<i64: 8, 128>}, {transform_indices = @transform_3, window_bounds = array<i64: 16, 128>}]} {
    %c0 = arith.constant 0 : index
    %c0_0 = arith.constant 0 : index
    %0 = vector.load %arg1[%c0, %c0_0] : memref<16x32xbf16, #tpu.memory_space<vmem>>, vector<16x32xbf16>
    %c0_1 = arith.constant 0 : index
    %c0_2 = arith.constant 0 : index
    %1 = vector.load %arg2[%c0_1, %c0_2] : memref<160x128xbf16, #tpu.memory_space<vmem>>, vector<160x128xbf16>
    %c0_3 = arith.constant 0 : index
    %c0_4 = arith.constant 0 : index
    %2 = vector.load %arg3[%c0_3, %c0_4] : memref<8x128xf32, #tpu.memory_space<vmem>>, vector<8x128xf32>
    %3 = vector.extract_strided_slice %1 {offsets = [0, 0], sizes = [32, 64], strides = [1, 1]} : vector<160x128xbf16> to vector<32x64xbf16>
    %cst = arith.constant dense<0.000000e+00> : vector<16x64xf32>
    %4 = tpu.matmul %0, %3, %cst {dimension_numbers = #tpu.dot_dimension_numbers<[1], [0], [0], [1], [0, 0, 1, 1], [], []>} : vector<16x32xbf16>, vector<32x64xbf16>, vector<16x64xf32> -> vector<16x64xf32>
    %5 = vector.extract_strided_slice %2 {offsets = [0, 0], sizes = [1, 64], strides = [1, 1]} : vector<8x128xf32> to vector<1x64xf32>
    %6 = vector.broadcast %5 : vector<1x64xf32> to vector<16x64xf32>
    %7 = arith.addf %4, %6 : vector<16x64xf32>
    %8 = math.tanh %7 : vector<16x64xf32>
    %9 = arith.truncf %8 : vector<16x64xf32> to vector<16x64xbf16>
    %10 = vector.extract_strided_slice %1 {offsets = [32, 0], sizes = [64, 64], strides = [1, 1]} : vector<160x128xbf16> to vector<64x64xbf16>
    %cst_5 = arith.constant dense<0.000000e+00> : vector<16x64xf32>
    %11 = tpu.matmul %9, %10, %cst_5 {dimension_numbers = #tpu.dot_dimension_numbers<[1], [0], [0], [1], [0, 0, 1, 1], [], []>} : vector<16x64xbf16>, vector<64x64xbf16>, vector<16x64xf32> -> vector<16x64xf32>
    %12 = vector.extract_strided_slice %2 {offsets = [1, 0], sizes = [1, 64], strides = [1, 1]} : vector<8x128xf32> to vector<1x64xf32>
    %13 = vector.broadcast %12 : vector<1x64xf32> to vector<16x64xf32>
    %14 = arith.addf %11, %13 : vector<16x64xf32>
    %15 = math.tanh %14 : vector<16x64xf32>
    %16 = arith.truncf %15 : vector<16x64xf32> to vector<16x64xbf16>
    %17 = vector.extract_strided_slice %1 {offsets = [96, 0], sizes = [64, 128], strides = [1, 1]} : vector<160x128xbf16> to vector<64x128xbf16>
    %cst_6 = arith.constant dense<0.000000e+00> : vector<16x128xf32>
    %18 = tpu.matmul %16, %17, %cst_6 {dimension_numbers = #tpu.dot_dimension_numbers<[1], [0], [0], [1], [0, 0, 1, 1], [], []>} : vector<16x64xbf16>, vector<64x128xbf16>, vector<16x128xf32> -> vector<16x128xf32>
    %19 = vector.extract_strided_slice %2 {offsets = [2, 0], sizes = [1, 128], strides = [1, 1]} : vector<8x128xf32> to vector<1x128xf32>
    %20 = vector.broadcast %19 : vector<1x128xf32> to vector<16x128xf32>
    %21 = arith.addf %18, %20 : vector<16x128xf32>
    %c0_7 = arith.constant 0 : index
    %c0_8 = arith.constant 0 : index
    %22 = vector.load %arg4[%c0_7, %c0_8] : memref<16x128xf32, #tpu.memory_space<vmem>>, vector<16x128xf32>
    tpu.vector_store %arg4[%c0_7, %c0_8], %21 {strides = array<i32>} : memref<16x128xf32, #tpu.memory_space<vmem>>, vector<16x128xf32>,
    return
  }
  func.func @transform_0(%arg0: i32) -> (i32, i32) {
    %c0_i32 = arith.constant 0 : i32
    %c0_i32_0 = arith.constant 0 : i32
    return %arg0, %c0_i32 : i32, i32
  }
  func.func @transform_1(%arg0: i32) -> (i32, i32) {
    %c0_i32 = arith.constant 0 : i32
    %c0_i32_0 = arith.constant 0 : i32
    %c0_i32_1 = arith.constant 0 : i32
    return %c0_i32, %c0_i32_0 : i32, i32
  }
  func.func @transform_2(%arg0: i32) -> (i32, i32) {
    %c0_i32 = arith.constant 0 : i32
    %c0_i32_0 = arith.constant 0 : i32
    %c0_i32_1 = arith.constant 0 : i32
    return %c0_i32, %c0_i32_0 : i32, i32
  }
  func.func @transform_3(%arg0: i32) -> (i32, i32) {
    %c0_i32 = arith.constant 0 : i32
    %c0_i32_0 = arith.constant 0 : i32
    return %arg0, %c0_i32 : i32, i32
  }
}

</mosaic_0001>

<llo_original>
// kernel: tpu_custom_call.1
$region0: #{tpu_custom_call.1}
  #allocation0 [shape = 'u32[]', space=smem, size = 0x4, offset = 0x4, fixed_abs, tag = 'smem constant byte address 0x4 - core index']
  #allocation1 [shape = 'u32[144,128]{1,0:T(1,128)}', space=vmem, size = 0x12000, scoped, tag = 'internal scratch']
  %s0 = inlined_call_operand.hbm [shape: bf16[16,32], index: 0, kind: input, shape index: {}]
  %s1 = inlined_call_operand.hbm [shape: bf16[160,128], index: 1, kind: input, shape index: {}]
  %s2 = inlined_call_operand.hbm [shape: f32[8,128], index: 2, kind: input, shape index: {}]
  %s3 = inlined_call_operand.hbm [shape: f32[16,128], index: 3, kind: output, shape index: {}]
  %s4 = sld [smem:[#allocation0]]
  $region34: #{tpu_custom_call.1} parent=0
    _
  %s6 = ssub.s32 1, %s4
  %s7 = scalar_select 0, %s6, %s4
  $region1: #{tpu_custom_call.1} parent=0
    #allocation2 [shape = 'u8[4096]{0}', space=vmem, size = 0x1000, scoped, tag = 'input window, operand 0, single buffered']
    #allocation3 [shape = 's32[1]{0}', space=sflag, size = 0x4, scoped, tag = 'scoped memory for tpu_custom_call.1']
    #allocation4 [shape = 's32[1]{0}', space=sflag, size = 0x4, scoped, tag = 'scoped memory for tpu_custom_call.1']
    #allocation5 [shape = 'u8[40960]{0}', space=vmem, size = 0xa000, scoped, tag = 'input window, operand 1, single buffered']
    #allocation6 [shape = 's32[1]{0}', space=sflag, size = 0x4, scoped, tag = 'scoped memory for tpu_custom_call.1']
    #allocation7 [shape = 'u8[4096]{0}', space=vmem, size = 0x1000, scoped, tag = 'input window, operand 2, single buffered']
    #allocation8 [shape = 'u8[8192]{0}', space=vmem, size = 0x2000, scoped, tag = 'output window, operand 0, single buffered']
    %8 = vsyncpa [#allocation3], 0
    %9 = vsyncpa [#allocation6], 0
    %10 = vsyncpa [#allocation4], 0
    // Predicated region
    $region2: #{tpu_custom_call.1} parent=1 // pred_check
      _
    $region3: #{tpu_custom_call.1} parent=1 // pred_check_branch
      %12 = sbr.rel (0) target = $region5
    $region4: #{tpu_custom_call.1} parent=1 // pred_region
      %s14 = ssub.s32 128, 128
      %15 = vsyncadd [#allocation3], %s14
      %s16 = sshll.u32 [#allocation2], 4
      %s17 = int_to_ptr.vmem [resolvable:$true] %s16
      %22 = dma.hbm_to_vmem [thread:$0]  %s0, 128, %s17, [#allocation3], 64, 64, 4
    $region5: #{tpu_custom_call.1} parent=1 // pred_fallthru
      _
    // Predicated region
    $region6: #{tpu_custom_call.1} parent=1 // pred_check
      _
    $region7: #{tpu_custom_call.1} parent=1 // pred_check_branch
      %24 = sbr.rel (0) target = $region9
    $region8: #{tpu_custom_call.1} parent=1 // pred_region
      %s26 = ssub.s32 1280, 1280
      %27 = vsyncadd [#allocation6], %s26
      %s28 = sshll.u32 [#allocation5], 4
      %s29 = int_to_ptr.vmem [resolvable:$true] %s28
      %34 = dma.hbm_to_vmem [thread:$0]  %s1, 1280, %s29, [#allocation6], 64, 64, 4
    $region9: #{tpu_custom_call.1} parent=1 // pred_fallthru
      _
    // Predicated region
    $region10: #{tpu_custom_call.1} parent=1 // pred_check
      _
    $region11: #{tpu_custom_call.1} parent=1 // pred_check_branch
      %36 = sbr.rel (0) target = $region13
    $region12: #{tpu_custom_call.1} parent=1 // pred_region
      %s38 = ssub.s32 128, 128
      %39 = vsyncadd [#allocation6], %s38
      %s41 = sshll.u32 [#allocation7], 4
      %s42 = int_to_ptr.vmem [resolvable:$true] %s41
      %44 = dma.hbm_to_vmem [thread:$0]  %s2, 128, %s42, [#allocation6]
    $region13: #{tpu_custom_call.1} parent=1 // pred_fallthru
      _
    // Predicated region
    $region14: #{tpu_custom_call.1} parent=1 // pred_check
      _
    $region15: #{tpu_custom_call.1} parent=1 // pred_check_branch
      %46 = sbr.rel (0) target = $region17
    $region16: #{tpu_custom_call.1} parent=1 // pred_region
      %47 = dma.done [#allocation3], 128
    $region17: #{tpu_custom_call.1} parent=1 // pred_fallthru
      _
    // Predicated region
    $region18: #{tpu_custom_call.1} parent=1 // pred_check
      _
    $region19: #{tpu_custom_call.1} parent=1 // pred_check_branch
      %49 = sbr.rel (0) target = $region21
    $region20: #{tpu_custom_call.1} parent=1 // pred_region
      %50 = dma.done [#allocation6], 1280
    $region21: #{tpu_custom_call.1} parent=1 // pred_fallthru
      _
    // Predicated region
    $region22: #{tpu_custom_call.1} parent=1 // pred_check
      _
    $region23: #{tpu_custom_call.1} parent=1 // pred_check_branch
      %52 = sbr.rel (0) target = $region25
    $region24: #{tpu_custom_call.1} parent=1 // pred_region
      %53 = dma.done [#allocation6], 128
    $region25: #{tpu_custom_call.1} parent=1 // pred_fallthru
      _
    %v55 = vld [vmem:[#allocation2] sm:$0xf]
    %v56 = vld [vmem:[#allocation2 + $0x4] sm:$0xf]
    %v57 = vld [vmem:[#allocation5] sm:$0xf]
    %v58 = vld [vmem:[#allocation5 + $0x4] sm:$0xf]
    %v59 = vld [vmem:[#allocation5 + $0x8] sm:$0xf]
    %v60 = vld [vmem:[#allocation5 + $0xc] sm:$0xf]
    %v61 = vld [vmem:[#allocation5 + $0x10] sm:$0xf]
    %v62 = vld [vmem:[#allocation5 + $0x14] sm:$0xf]
    %v63 = vld [vmem:[#allocation5 + $0x18] sm:$0xf]
    %v64 = vld [vmem:[#allocation5 + $0x1c] sm:$0xf]
    %v65 = vld [vmem:[#allocation5 + $0x20] sm:$0xf]
    %v66 = vld [vmem:[#allocation5 + $0x24] sm:$0xf]
    %v67 = vld [vmem:[#allocation5 + $0x28] sm:$0xf]
    %v68 = vld [vmem:[#allocation5 + $0x2c] sm:$0xf]
    %v69 = vld [vmem:[#allocation5 + $0x30] sm:$0xf]
    %v70 = vld [vmem:[#allocation5 + $0x34] sm:$0xf]
    %v71 = vld [vmem:[#allocation5 + $0x38] sm:$0xf]
    %v72 = vld [vmem:[#allocation5 + $0x3c] sm:$0xf]
    %v73 = vld [vmem:[#allocation5 + $0x40] sm:$0xf]
    %v74 = vld [vmem:[#allocation5 + $0x44] sm:$0xf]
    %v75 = vld [vmem:[#allocation5 + $0x48] sm:$0xf]
    %v76 = vld [vmem:[#allocation5 + $0x4c] sm:$0xf]
    %v77 = vld [vmem:[#allocation7] sm:$0xff]
    %v78 = vlaneseq
    %v79 = vshrl.u32 %v78, 7
    %v80 = vsub.s32 0, %v79
    %v81 = vrot.slane %v77, %v80
    %v84 = vunpack.c.l.b16 %v55
    %v85 = vunpack.c.l.b16 %v56
    %v86 = vpack.c.b16 %v85, %v84
    %v91 = vunpack.c.l.b16 %v57
    %v92 = vunpack.c.l.b16 %v58
    %v93 = vunpack.c.l.b16 %v59
    %v94 = vunpack.c.l.b16 %v60
    %v95 = vpack.c.b16 %v92, %v91
    %v96 = vpack.c.b16 %v94, %v93
    %vm99 = vcmask 261120
    %v101 = vsel %vm99, %v86, 0
    %103 = vmatprep.subr.bf16.mxu0 0
    %104 = vmatpush1.bf16.msra.mxu0 0
    %105 = vmatprep.subr.bf16.mxu0 0
    %106 = vmatpush1.bf16.msra.mxu0 0
    %107 = vmatprep.subr.bf16.mxu0 0
    %108 = vmatpush1.bf16.msra.mxu0 0
    %109 = vmatprep.subr.bf16.mxu0 0
    %110 = vmatpush1.bf16.msra.mxu0 0
    %111 = vmatprep.subr.bf16.mxu0 0
    %112 = vmatpush1.bf16.msra.mxu0 0
    %113 = vmatprep.subr.bf16.mxu0 0
    %114 = vmatpush1.bf16.msra.mxu0 0
    %115 = vmatprep.subr.bf16.mxu0 0
    %116 = vmatpush1.bf16.msra.mxu0 %v96
    %117 = vmatprep.subr.bf16.mxu0 0
    %118 = vmatpush1.bf16.msra.mxu0 %v95
    %119 = vmatprep.subr.bf16.mxu0 0
    %120 = vmatpush2.bf16.msra.mxu0 0
    %121 = vmatprep.subr.bf16.mxu0 0
    %122 = vmatpush2.bf16.msra.mxu0 0
    %123 = vmatprep.subr.bf16.mxu0 0
    %124 = vmatpush2.bf16.msra.mxu0 0
    %125 = vmatprep.subr.bf16.mxu0 0
    %126 = vmatpush2.bf16.msra.mxu0 0
    %127 = vmatprep.subr.bf16.mxu0 0
    %128 = vmatpush2.bf16.msra.mxu0 0
    %129 = vmatprep.subr.bf16.mxu0 0
    %130 = vmatpush2.bf16.msra.mxu0 0
    %131 = vmatprep.subr.bf16.mxu0 0
    %132 = vmatpush2.bf16.msra.mxu0 0
    %133 = vmatprep.subr.bf16.mxu0 0
    %134 = vmatpush2.bf16.msra.mxu0 0
    %135 = vmatprep.mubr.bf16.mxu0 0
    %136 = vmatmul.mubr.bf16.gmra.mxu0 %v101
    %v137 = vpop.f32.mrf.mxu0
    %v138 = vadd.f32 %v81, %v137
    %v139 = vpop.f32.mrf.mxu0
    %v140 = vpop.f32.mrf.mxu0
    %v141 = vadd.f32 %v81, %v140
    %v142 = vpop.f32.mrf.mxu0
    %143 = vdwg.mxu0
    %v144 = vtanh.pop %v138
    %v145 = vtanh.pop %v141
    %v146 = vpack.c.bf16 %v145, %v144
    %v147 = vlaneseq
    %v148 = vshrl.u32 %v147, 7
    %v149 = vsub.s32 1, %v148
    %v150 = vrot.slane %v77, %v149
    %v159 = vunpack.c.l.b16 %v61
    %v160 = vunpack.c.l.b16 %v62
    %v161 = vunpack.c.l.b16 %v63
    %v162 = vunpack.c.l.b16 %v64
    %v163 = vunpack.c.l.b16 %v65
    %v164 = vunpack.c.l.b16 %v66
    %v165 = vunpack.c.l.b16 %v67
    %v166 = vunpack.c.l.b16 %v68
    %v167 = vpack.c.b16 %v160, %v159
    %v168 = vpack.c.b16 %v162, %v161
    %v169 = vpack.c.b16 %v164, %v163
    %v170 = vpack.c.b16 %v166, %v165
    %vm175 = vcmask 523264
    %v177 = vsel %vm175, %v146, 0
    %179 = vmatprep.subr.bf16.mxu0 0
    %180 = vmatpush1.bf16.msra.mxu0 0
    %181 = vmatprep.subr.bf16.mxu0 0
    %182 = vmatpush1.bf16.msra.mxu0 0
    %183 = vmatprep.subr.bf16.mxu0 0
    %184 = vmatpush1.bf16.msra.mxu0 0
    %185 = vmatprep.subr.bf16.mxu0 0
    %186 = vmatpush1.bf16.msra.mxu0 0
    %187 = vmatprep.subr.bf16.mxu0 0
    %188 = vmatpush1.bf16.msra.mxu0 %v170
    %189 = vmatprep.subr.bf16.mxu0 0
    %190 = vmatpush1.bf16.msra.mxu0 %v169
    %191 = vmatprep.subr.bf16.mxu0 0
    %192 = vmatpush1.bf16.msra.mxu0 %v168
    %193 = vmatprep.subr.bf16.mxu0 0
    %194 = vmatpush1.bf16.msra.mxu0 %v167
    %195 = vmatprep.subr.bf16.mxu0 0
    %196 = vmatpush2.bf16.msra.mxu0 0
    %197 = vmatprep.subr.bf16.mxu0 0
    %198 = vmatpush2.bf16.msra.mxu0 0
    %199 = vmatprep.subr.bf16.mxu0 0
    %200 = vmatpush2.bf16.msra.mxu0 0
    %201 = vmatprep.subr.bf16.mxu0 0
    %202 = vmatpush2.bf16.msra.mxu0 0
    %203 = vmatprep.subr.bf16.mxu0 0
    %204 = vmatpush2.bf16.msra.mxu0 0
    %205 = vmatprep.subr.bf16.mxu0 0
    %206 = vmatpush2.bf16.msra.mxu0 0
    %207 = vmatprep.subr.bf16.mxu0 0
    %208 = vmatpush2.bf16.msra.mxu0 0
    %209 = vmatprep.subr.bf16.mxu0 0
    %210 = vmatpush2.bf16.msra.mxu0 0
    %211 = vmatprep.mubr.bf16.mxu0 0
    %212 = vmatmul.mubr.bf16.gmra.mxu0 %v177
    %v213 = vpop.f32.mrf.mxu0
    %v214 = vadd.f32 %v150, %v213
    %v215 = vpop.f32.mrf.mxu0
    %v216 = vpop.f32.mrf.mxu0
    %v217 = vadd.f32 %v150, %v216
    %v218 = vpop.f32.mrf.mxu0
    %219 = vdwg.mxu0
    %v220 = vtanh.pop %v214
    %v221 = vtanh.pop %v217
    %v222 = vpack.c.bf16 %v221, %v220
    %v223 = vlaneseq
    %v224 = vshrl.u32 %v223, 7
    %v225 = vsub.s32 2, %v224
    %v226 = vrot.slane %v77, %v225
    %v235 = vunpack.c.l.b16 %v69
    %v236 = vunpack.c.l.b16 %v70
    %v237 = vunpack.c.l.b16 %v71
    %v238 = vunpack.c.l.b16 %v72
    %v239 = vunpack.c.l.b16 %v73
    %v240 = vunpack.c.l.b16 %v74
    %v241 = vunpack.c.l.b16 %v75
    %v242 = vunpack.c.l.b16 %v76
    %v243 = vpack.c.b16 %v236, %v235
    %v244 = vpack.c.b16 %v238, %v237
    %v245 = vpack.c.b16 %v240, %v239
    %v246 = vpack.c.b16 %v242, %v241
    %v252 = vsel %vm175, %v222, 0
    %254 = vmatprep.subr.bf16.mxu0 0
    %255 = vmatpush1.bf16.msra.mxu0 0
    %256 = vmatprep.subr.bf16.mxu0 0
    %257 = vmatpush1.bf16.msra.mxu0 0
    %258 = vmatprep.subr.bf16.mxu0 0
    %259 = vmatpush1.bf16.msra.mxu0 0
    %260 = vmatprep.subr.bf16.mxu0 0
    %261 = vmatpush1.bf16.msra.mxu0 0
    %262 = vmatprep.subr.bf16.mxu0 0
    %263 = vmatpush1.bf16.msra.mxu0 %v246
    %264 = vmatprep.subr.bf16.mxu0 0
    %265 = vmatpush1.bf16.msra.mxu0 %v245
    %266 = vmatprep.subr.bf16.mxu0 0
    %267 = vmatpush1.bf16.msra.mxu0 %v244
    %268 = vmatprep.subr.bf16.mxu0 0
    %269 = vmatpush1.bf16.msra.mxu0 %v243
    %270 = vmatprep.subr.bf16.mxu0 0
    %271 = vmatpush2.bf16.msra.mxu0 0
    %272 = vmatprep.subr.bf16.mxu0 0
    %273 = vmatpush2.bf16.msra.mxu0 0
    %274 = vmatprep.subr.bf16.mxu0 0
    %275 = vmatpush2.bf16.msra.mxu0 0
    %276 = vmatprep.subr.bf16.mxu0 0
    %277 = vmatpush2.bf16.msra.mxu0 0
    %278 = vmatprep.subr.bf16.mxu0 0
    %279 = vmatpush2.bf16.msra.mxu0 0
    %280 = vmatprep.subr.bf16.mxu0 0
    %281 = vmatpush2.bf16.msra.mxu0 0
    %282 = vmatprep.subr.bf16.mxu0 0
    %283 = vmatpush2.bf16.msra.mxu0 0
    %284 = vmatprep.subr.bf16.mxu0 0
    %285 = vmatpush2.bf16.msra.mxu0 0
    %286 = vmatprep.mubr.bf16.mxu0 0
    %287 = vmatmul.mubr.bf16.gmra.mxu0 %v252
    %v288 = vpop.f32.mrf.mxu0
    %v289 = vadd.f32 %v226, %v288
    %v290 = vpop.f32.mrf.mxu0
    %v291 = vpop.f32.mrf.mxu0
    %v292 = vadd.f32 %v226, %v291
    %v293 = vpop.f32.mrf.mxu0
    %294 = vdwg.mxu0
    %295 = vst [vmem:[#allocation8] sm:$0xff] %v289
    %296 = vst [vmem:[#allocation8 + $0x8] sm:$0xff] %v292
    // Predicated region
    $region26: #{tpu_custom_call.1} parent=1 // pred_check
      _
    $region27: #{tpu_custom_call.1} parent=1 // pred_check_branch
      %298 = sbr.rel (0) target = $region29
    $region28: #{tpu_custom_call.1} parent=1 // pred_region
      %s300 = ssub.s32 256, 256
      %301 = vsyncadd [#allocation4], %s300
      %s302 = sshll.u32 [#allocation8], 4
      %s303 = int_to_ptr.vmem [resolvable:$true] %s302
      %308 = dma.vmem_to_hbm [thread:$0]  %s303, 256, %s3, [#allocation4], 128, 128, 8
    $region29: #{tpu_custom_call.1} parent=1 // pred_fallthru
      _
    // Predicated region
    $region30: #{tpu_custom_call.1} parent=1 // pred_check
      _
    $region31: #{tpu_custom_call.1} parent=1 // pred_check_branch
      %310 = sbr.rel (0) target = $region33
    $region32: #{tpu_custom_call.1} parent=1 // pred_region
      %311 = dma.done [#allocation4], 256
    $region33: #{tpu_custom_call.1} parent=1 // pred_fallthru
      _
    %312 = vsyncpa [#allocation3], 1
    %313 = vsyncpa [#allocation6], 1
    %314 = vsyncpa [#allocation4], 1

</llo_original>
